<compile_context>
chip_gen: v7x
topology: tpu7x:2x2x1
jax: 0.10.0
libtpu: 0.0.40
codegen_flags: <defaults>
</compile_context>

<pallas_src>
import jax
import jax.numpy as jnp
from jax.experimental import pallas as pl
from jax.experimental.pallas import tpu as pltpu

PAD_OHW = 256  # spatial axis (OH*OW = 196) explicitly padded to a lane-aligned width


# ---------------- Fused Pallas kernel ----------------

def cnn_fused_kernel(patches_ref, wc_ref, wl_ref, bl_ref, out_ref):
    """Fused conv(+bias folded, ReLU) -> linear(+bias) -> softmax.

    patches: (CKK+1, B*PAD)          im2col'd input, ones row appended (bias), lane-dense,
                                     batch b occupies lanes [b*PAD, (b+1)*PAD)
    wc     : (Cout, CKK+1)           flattened conv weight with conv bias as last column
    wl     : (nclasses, Cout, PAD)   linear weight in NCHW-flatten order, zero-padded lanes
    bl     : (1, nclasses)           linear bias
    out    : (B, nclasses)           softmax probabilities
    """
    B, ncls = out_ref.shape
    PAD = wl_ref.shape[2]

    # --- Conv2d (+bias) for ALL batch elements: a single lane-dense MXU matmul ---
    acc_all = jnp.dot(wc_ref[...], patches_ref[...],
                      preferred_element_type=jnp.float32)        # (Cout, B*PAD)

    # --- Per-batch ReLU + linear + bias, statically unrolled (B, ncls small) ---
    rows = []
    for b in range(B):  # static unroll
        acc_b = jnp.maximum(acc_all[:, b * PAD:(b + 1) * PAD], 0.0)   # (Cout, PAD)
        cls = []
        for n in range(ncls):  # static unroll: per-class multiply + full reduce
            p = acc_b * wl_ref[n]                                     # (Cout, PAD)
            s = jnp.sum(jnp.sum(p, axis=1, keepdims=True),
                        axis=0, keepdims=True)                        # (1, 1)
            cls.append(s)
        rows.append(jnp.concatenate(cls, axis=1))                     # (1, ncls)
    scores = jnp.concatenate(rows, axis=0) + bl_ref[...]              # (B, ncls)

    # --- Softmax(dim=1), numerically stable ---
    m = jnp.max(scores, axis=1, keepdims=True)
    e = jnp.exp(scores - m)
    denom = jnp.sum(e, axis=1, keepdims=True)
    out_ref[...] = (e * pl.reciprocal(denom, approx=False)).astype(out_ref.dtype)


# ---------------- One-time parameter repacking (hoisted off the hot path) ----------------

def prepare_params(conv_w, conv_b, lin_w, lin_b, pad_ohw=PAD_OHW):
    """Repack PyTorch-layout parameters once for the fused kernel."""
    Cout, Cin, K, _ = conv_w.shape
    nclasses, nfts = lin_w.shape
    ohw = nfts // Cout
    wc = conv_w.reshape(Cout, Cin * K * K)
    # Fold conv bias in as an extra contraction column (paired with a ones row in patches).
    wc = jnp.concatenate([wc, conv_b.reshape(Cout, 1)], axis=1)       # (Cout, CKK+1)
    # Linear weight in NCHW-flatten order (c*OH*OW + oh*OW + ow), zero-padded lanes.
    wl = lin_w.reshape(nclasses, Cout, ohw)
    wl = jnp.pad(wl, ((0, 0), (0, 0), (0, pad_ohw - ohw)))            # (ncls, Cout, PAD)
    bl = lin_b.reshape(1, nclasses)
    return wc, wl, bl


# ---------------- im2col (XLA glue, tiny) ----------------

def _im2col_padded(x, K, pad_ohw=PAD_OHW):
    """Returns (Cin*K*K + 1, B*pad_ohw): ones row appended (bias), batches lane-concatenated.

    patches[c*K*K + kh*K + kw, b*pad_ohw + oh*OW + ow] = x[b, c, oh+kh, ow+kw]
    """
    B, Cin, H, W = x.shape
    OH, OW = H - K + 1, W - K + 1
    cols = [x[:, :, kh:kh + OH, kw:kw + OW] for kh in range(K) for kw in range(K)]
    p = jnp.stack(cols, axis=2).reshape(B, Cin * K * K, OH * OW)      # (B, CKK, OHW)
    p = jnp.pad(p, ((0, 0), (0, 0), (0, pad_ohw - OH * OW)))          # pad lanes -> PAD
    ones = jnp.ones((B, 1, pad_ohw), x.dtype)                         # bias row
    p = jnp.concatenate([p, ones], axis=1)                            # (B, CKK+1, PAD)
    return p.transpose(1, 0, 2).reshape(Cin * K * K + 1, B * pad_ohw)


# ---------------- Forward wrapper ----------------

@jax.jit
def cnn_forward(x, wc, wl, bl):
    """x: (B, Cin, H, W) NCHW; returns (B, nclasses) softmax probabilities."""
    B, Cin, H, W = x.shape
    Cout, CKK1 = wc.shape
    K = int(round(((CKK1 - 1) // Cin) ** 0.5))
    nclasses = bl.shape[1]
    PAD = wl.shape[2]

    # TODO(synk): patch extraction stays as (tiny, fused) XLA glue; doing it fully
    # in-kernel needs a (Cin, OH, OW)->(Cin, OH*OW) lane-merging reshape that is not
    # reliably supported by the Mosaic lowering at non-128-multiple widths.
    patches = _im2col_padded(x, K, PAD)                               # (CKK+1, B*PAD)

    flops = 2 * Cout * CKK1 * (B * PAD) + 2 * B * nclasses * Cout * PAD
    bytes_accessed = 4 * (patches.size + wc.size + wl.size + bl.size + B * nclasses)

    return pl.pallas_call(
        cnn_fused_kernel,
        out_shape=jax.ShapeDtypeStruct((B, nclasses), jnp.float32),
        in_specs=[pl.BlockSpec(memory_space=pltpu.MemorySpace.VMEM) for _ in range(4)],
        out_specs=pl.BlockSpec(memory_space=pltpu.MemorySpace.VMEM),
        cost_estimate=pl.CostEstimate(
            flops=int(flops),
            transcendentals=int(B * nclasses),
            bytes_accessed=int(bytes_accessed),
        ),
    )(patches, wc, wl, bl)


# ---------------- Reference (pure JAX) for sanity check ----------------

def cnn_forward_ref(x, conv_w, conv_b, lin_w, lin_b):
    y = jax.lax.conv_general_dilated(
        x, conv_w, window_strides=(1, 1), padding="VALID",
        dimension_numbers=("NCHW", "OIHW", "NCHW"))
    y = y + conv_b.reshape(1, -1, 1, 1)
    y = jnp.maximum(y, 0.0)
    y = y.reshape(y.shape[0], -1)                   # PyTorch NCHW flatten order
    s = y @ lin_w.T + lin_b
    return jax.nn.softmax(s, axis=1)


if __name__ == "__main__":
    # Module config consistent with CNN(inshape=(4, 16, 16), nclasses=5)
    B = 2
    Cin, H, W = 4, 16, 16
    nclasses = 5
    Cout, K = 16, 3
    OH, OW = H - K + 1, W - K + 1
    nfts = Cout * OH * OW  # 16 * 14 * 14 = 3136

    key = jax.random.PRNGKey(0)
    kx, kcw, klw = jax.random.split(key, 3)

    x = jax.random.normal(kx, (B, Cin, H, W), dtype=jnp.float32)

    # Deterministic synthetic parameters (shapes/init match the PyTorch module):
    # conv: xavier_uniform -> U(-a, a); bias = 0
    fan_in, fan_out = Cin * K * K, Cout * K * K
    a = (6.0 / (fan_in + fan_out)) ** 0.5
    conv_w = jax.random.uniform(kcw, (Cout, Cin, K, K), minval=-a, maxval=a,
                                dtype=jnp.float32)
    conv_b = jnp.zeros((Cout,), dtype=jnp.float32)
    # linear: N(0, 0.01); bias = 0
    lin_w = 0.01 * jax.random.normal(klw, (nclasses, nfts), dtype=jnp.float32)
    lin_b = jnp.zeros((nclasses,), dtype=jnp.float32)

    # One-time weight repacking (hoisted off the per-call path).
    wc, wl, bl = prepare_params(conv_w, conv_b, lin_w, lin_b)

    out = cnn_forward(x, wc, wl, bl)
    out = jax.block_until_ready(out)

    ref = cnn_forward_ref(x, conv_w, conv_b, lin_w, lin_b)
    assert out.shape == (B, nclasses)
    assert jnp.allclose(out, ref, atol=1e-5, rtol=1e-5), "mismatch vs reference"
    assert jnp.allclose(jnp.sum(out, axis=1), 1.0, atol=1e-5)

    print("KERNEL_OK")
</pallas_src>

<mosaic_0001>
module attributes {stable_mosaic.version = 11 : i64} {
  func.func @cnn_fused_kernel(%arg0: memref<37x512xf32, #tpu.memory_space<vmem>>, %arg1: memref<16x37xf32, #tpu.memory_space<vmem>>, %arg2: memref<5x16x256xf32, #tpu.memory_space<vmem>>, %arg3: memref<1x5xf32, #tpu.memory_space<vmem>>, %arg4: memref<2x5xf32, #tpu.memory_space<vmem>>) attributes {dimension_semantics = [], scalar_prefetch = 0 : i64, scratch_operands = 0 : i64, tpu.core_type = #tpu.core_type<tc>} {
    %c0 = arith.constant 0 : index
    %c0_0 = arith.constant 0 : index
    %0 = vector.load %arg1[%c0, %c0_0] : memref<16x37xf32, #tpu.memory_space<vmem>>, vector<16x37xf32>
    %c0_1 = arith.constant 0 : index
    %c0_2 = arith.constant 0 : index
    %1 = vector.load %arg0[%c0_1, %c0_2] : memref<37x512xf32, #tpu.memory_space<vmem>>, vector<37x512xf32>
    %cst = arith.constant dense<0.000000e+00> : vector<16x512xf32>
    %2 = tpu.matmul %0, %1, %cst {dimension_numbers = #tpu.dot_dimension_numbers<[1], [0], [0], [1], [0, 0, 1, 1], [], []>} : vector<16x37xf32>, vector<37x512xf32>, vector<16x512xf32> -> vector<16x512xf32>
    %3 = vector.extract_strided_slice %2 {offsets = [0, 0], sizes = [16, 256], strides = [1, 1]} : vector<16x512xf32> to vector<16x256xf32>
    %cst_3 = arith.constant 0.000000e+00 : f32
    %4 = vector.broadcast %cst_3 : f32 to vector<16x256xf32>
    %5 = arith.maximumf %3, %4 : vector<16x256xf32>
    %c0_4 = arith.constant 0 : index
    %c0_5 = arith.constant 0 : index
    %c0_6 = arith.constant 0 : index
    %6 = vector.load %arg2[%c0_4, %c0_5, %c0_6] : memref<5x16x256xf32, #tpu.memory_space<vmem>>, vector<1x16x256xf32>
    %7 = vector.shape_cast %6 : vector<1x16x256xf32> to vector<16x256xf32>
    %8 = arith.mulf %5, %7 : vector<16x256xf32>
    %cst_7 = arith.constant dense<0.000000e+00> : vector<16xf32>
    %9 = vector.multi_reduction <add>, %8, %cst_7 [1] : vector<16x256xf32> to vector<16xf32>
    %10 = vector.shape_cast %9 : vector<16xf32> to vector<16x1xf32>
    %cst_8 = arith.constant dense<0.000000e+00> : vector<1xf32>
    %11 = vector.multi_reduction <add>, %10, %cst_8 [0] : vector<16x1xf32> to vector<1xf32>
    %12 = vector.shape_cast %11 : vector<1xf32> to vector<1x1xf32>
    %c1 = arith.constant 1 : index
    %c0_9 = arith.constant 0 : index
    %c0_10 = arith.constant 0 : index
    %13 = vector.load %arg2[%c1, %c0_9, %c0_10] : memref<5x16x256xf32, #tpu.memory_space<vmem>>, vector<1x16x256xf32>
    %14 = vector.shape_cast %13 : vector<1x16x256xf32> to vector<16x256xf32>
    %15 = arith.mulf %5, %14 : vector<16x256xf32>
    %cst_11 = arith.constant dense<0.000000e+00> : vector<16xf32>
    %16 = vector.multi_reduction <add>, %15, %cst_11 [1] : vector<16x256xf32> to vector<16xf32>
    %17 = vector.shape_cast %16 : vector<16xf32> to vector<16x1xf32>
    %cst_12 = arith.constant dense<0.000000e+00> : vector<1xf32>
    %18 = vector.multi_reduction <add>, %17, %cst_12 [0] : vector<16x1xf32> to vector<1xf32>
    %19 = vector.shape_cast %18 : vector<1xf32> to vector<1x1xf32>
    %c2 = arith.constant 2 : index
    %c0_13 = arith.constant 0 : index
    %c0_14 = arith.constant 0 : index
    %20 = vector.load %arg2[%c2, %c0_13, %c0_14] : memref<5x16x256xf32, #tpu.memory_space<vmem>>, vector<1x16x256xf32>
    %21 = vector.shape_cast %20 : vector<1x16x256xf32> to vector<16x256xf32>
    %22 = arith.mulf %5, %21 : vector<16x256xf32>
    %cst_15 = arith.constant dense<0.000000e+00> : vector<16xf32>
    %23 = vector.multi_reduction <add>, %22, %cst_15 [1] : vector<16x256xf32> to vector<16xf32>
    %24 = vector.shape_cast %23 : vector<16xf32> to vector<16x1xf32>
    %cst_16 = arith.constant dense<0.000000e+00> : vector<1xf32>
    %25 = vector.multi_reduction <add>, %24, %cst_16 [0] : vector<16x1xf32> to vector<1xf32>
    %26 = vector.shape_cast %25 : vector<1xf32> to vector<1x1xf32>
    %c3 = arith.constant 3 : index
    %c0_17 = arith.constant 0 : index
    %c0_18 = arith.constant 0 : index
    %27 = vector.load %arg2[%c3, %c0_17, %c0_18] : memref<5x16x256xf32, #tpu.memory_space<vmem>>, vector<1x16x256xf32>
    %28 = vector.shape_cast %27 : vector<1x16x256xf32> to vector<16x256xf32>
    %29 = arith.mulf %5, %28 : vector<16x256xf32>
    %cst_19 = arith.constant dense<0.000000e+00> : vector<16xf32>
    %30 = vector.multi_reduction <add>, %29, %cst_19 [1] : vector<16x256xf32> to vector<16xf32>
    %31 = vector.shape_cast %30 : vector<16xf32> to vector<16x1xf32>
    %cst_20 = arith.constant dense<0.000000e+00> : vector<1xf32>
    %32 = vector.multi_reduction <add>, %31, %cst_20 [0] : vector<16x1xf32> to vector<1xf32>
    %33 = vector.shape_cast %32 : vector<1xf32> to vector<1x1xf32>
    %c4 = arith.constant 4 : index
    %c0_21 = arith.constant 0 : index
    %c0_22 = arith.constant 0 : index
    %34 = vector.load %arg2[%c4, %c0_21, %c0_22] : memref<5x16x256xf32, #tpu.memory_space<vmem>>, vector<1x16x256xf32>
    %35 = vector.shape_cast %34 : vector<1x16x256xf32> to vector<16x256xf32>
    %36 = arith.mulf %5, %35 : vector<16x256xf32>
    %cst_23 = arith.constant dense<0.000000e+00> : vector<16xf32>
    %37 = vector.multi_reduction <add>, %36, %cst_23 [1] : vector<16x256xf32> to vector<16xf32>
    %38 = vector.shape_cast %37 : vector<16xf32> to vector<16x1xf32>
    %cst_24 = arith.constant dense<0.000000e+00> : vector<1xf32>
    %39 = vector.multi_reduction <add>, %38, %cst_24 [0] : vector<16x1xf32> to vector<1xf32>
    %40 = vector.shape_cast %39 : vector<1xf32> to vector<1x1xf32>
    %41 = tpu.concatenate %12, %19, %26, %33, %40 in 1 : vector<1x1xf32>, vector<1x1xf32>, vector<1x1xf32>, vector<1x1xf32>, vector<1x1xf32> -> vector<1x5xf32>
    %42 = vector.extract_strided_slice %2 {offsets = [0, 256], sizes = [16, 256], strides = [1, 1]} : vector<16x512xf32> to vector<16x256xf32>
    %cst_25 = arith.constant 0.000000e+00 : f32
    %43 = vector.broadcast %cst_25 : f32 to vector<16x256xf32>
    %44 = arith.maximumf %42, %43 : vector<16x256xf32>
    %c0_26 = arith.constant 0 : index
    %c0_27 = arith.constant 0 : index
    %c0_28 = arith.constant 0 : index
    %45 = vector.load %arg2[%c0_26, %c0_27, %c0_28] : memref<5x16x256xf32, #tpu.memory_space<vmem>>, vector<1x16x256xf32>
    %46 = vector.shape_cast %45 : vector<1x16x256xf32> to vector<16x256xf32>
    %47 = arith.mulf %44, %46 : vector<16x256xf32>
    %cst_29 = arith.constant dense<0.000000e+00> : vector<16xf32>
    %48 = vector.multi_reduction <add>, %47, %cst_29 [1] : vector<16x256xf32> to vector<16xf32>
    %49 = vector.shape_cast %48 : vector<16xf32> to vector<16x1xf32>
    %cst_30 = arith.constant dense<0.000000e+00> : vector<1xf32>
    %50 = vector.multi_reduction <add>, %49, %cst_30 [0] : vector<16x1xf32> to vector<1xf32>
    %51 = vector.shape_cast %50 : vector<1xf32> to vector<1x1xf32>
    %c1_31 = arith.constant 1 : index
    %c0_32 = arith.constant 0 : index
    %c0_33 = arith.constant 0 : index
    %52 = vector.load %arg2[%c1_31, %c0_32, %c0_33] : memref<5x16x256xf32, #tpu.memory_space<vmem>>, vector<1x16x256xf32>
    %53 = vector.shape_cast %52 : vector<1x16x256xf32> to vector<16x256xf32>
    %54 = arith.mulf %44, %53 : vector<16x256xf32>
    %cst_34 = arith.constant dense<0.000000e+00> : vector<16xf32>
    %55 = vector.multi_reduction <add>, %54, %cst_34 [1] : vector<16x256xf32> to vector<16xf32>
    %56 = vector.shape_cast %55 : vector<16xf32> to vector<16x1xf32>
    %cst_35 = arith.constant dense<0.000000e+00> : vector<1xf32>
    %57 = vector.multi_reduction <add>, %56, %cst_35 [0] : vector<16x1xf32> to vector<1xf32>
    %58 = vector.shape_cast %57 : vector<1xf32> to vector<1x1xf32>
    %c2_36 = arith.constant 2 : index
    %c0_37 = arith.constant 0 : index
    %c0_38 = arith.constant 0 : index
    %59 = vector.load %arg2[%c2_36, %c0_37, %c0_38] : memref<5x16x256xf32, #tpu.memory_space<vmem>>, vector<1x16x256xf32>
    %60 = vector.shape_cast %59 : vector<1x16x256xf32> to vector<16x256xf32>
    %61 = arith.mulf %44, %60 : vector<16x256xf32>
    %cst_39 = arith.constant dense<0.000000e+00> : vector<16xf32>
    %62 = vector.multi_reduction <add>, %61, %cst_39 [1] : vector<16x256xf32> to vector<16xf32>
    %63 = vector.shape_cast %62 : vector<16xf32> to vector<16x1xf32>
    %cst_40 = arith.constant dense<0.000000e+00> : vector<1xf32>
    %64 = vector.multi_reduction <add>, %63, %cst_40 [0] : vector<16x1xf32> to vector<1xf32>
    %65 = vector.shape_cast %64 : vector<1xf32> to vector<1x1xf32>
    %c3_41 = arith.constant 3 : index
    %c0_42 = arith.constant 0 : index
    %c0_43 = arith.constant 0 : index
    %66 = vector.load %arg2[%c3_41, %c0_42, %c0_43] : memref<5x16x256xf32, #tpu.memory_space<vmem>>, vector<1x16x256xf32>
    %67 = vector.shape_cast %66 : vector<1x16x256xf32> to vector<16x256xf32>
    %68 = arith.mulf %44, %67 : vector<16x256xf32>
    %cst_44 = arith.constant dense<0.000000e+00> : vector<16xf32>
    %69 = vector.multi_reduction <add>, %68, %cst_44 [1] : vector<16x256xf32> to vector<16xf32>
    %70 = vector.shape_cast %69 : vector<16xf32> to vector<16x1xf32>
    %cst_45 = arith.constant dense<0.000000e+00> : vector<1xf32>
    %71 = vector.multi_reduction <add>, %70, %cst_45 [0] : vector<16x1xf32> to vector<1xf32>
    %72 = vector.shape_cast %71 : vector<1xf32> to vector<1x1xf32>
    %c4_46 = arith.constant 4 : index
    %c0_47 = arith.constant 0 : index
    %c0_48 = arith.constant 0 : index
    %73 = vector.load %arg2[%c4_46, %c0_47, %c0_48] : memref<5x16x256xf32, #tpu.memory_space<vmem>>, vector<1x16x256xf32>
    %74 = vector.shape_cast %73 : vector<1x16x256xf32> to vector<16x256xf32>
    %75 = arith.mulf %44, %74 : vector<16x256xf32>
    %cst_49 = arith.constant dense<0.000000e+00> : vector<16xf32>
    %76 = vector.multi_reduction <add>, %75, %cst_49 [1] : vector<16x256xf32> to vector<16xf32>
    %77 = vector.shape_cast %76 : vector<16xf32> to vector<16x1xf32>
    %cst_50 = arith.constant dense<0.000000e+00> : vector<1xf32>
    %78 = vector.multi_reduction <add>, %77, %cst_50 [0] : vector<16x1xf32> to vector<1xf32>
    %79 = vector.shape_cast %78 : vector<1xf32> to vector<1x1xf32>
    %80 = tpu.concatenate %51, %58, %65, %72, %79 in 1 : vector<1x1xf32>, vector<1x1xf32>, vector<1x1xf32>, vector<1x1xf32>, vector<1x1xf32> -> vector<1x5xf32>
    %81 = tpu.concatenate %41, %80 in 0 : vector<1x5xf32>, vector<1x5xf32> -> vector<2x5xf32>
    %c0_51 = arith.constant 0 : index
    %c0_52 = arith.constant 0 : index
    %82 = vector.load %arg3[%c0_51, %c0_52] : memref<1x5xf32, #tpu.memory_space<vmem>>, vector<1x5xf32>
    %83 = vector.broadcast %82 : vector<1x5xf32> to vector<2x5xf32>
    %84 = arith.addf %81, %83 : vector<2x5xf32>
    %cst_53 = arith.constant dense<0xFF800000> : vector<2xf32>
    %85 = vector.multi_reduction <maximumf>, %84, %cst_53 [1] : vector<2x5xf32> to vector<2xf32>
    %86 = vector.shape_cast %85 : vector<2xf32> to vector<2x1xf32>
    %87 = vector.broadcast %86 : vector<2x1xf32> to vector<2x5xf32>
    %88 = arith.subf %84, %87 : vector<2x5xf32>
    %89 = math.exp %88 : vector<2x5xf32>
    %cst_54 = arith.constant dense<0.000000e+00> : vector<2xf32>
    %90 = vector.multi_reduction <add>, %89, %cst_54 [1] : vector<2x5xf32> to vector<2xf32>
    %91 = vector.shape_cast %90 : vector<2xf32> to vector<2x1xf32>
    %92 = tpu.reciprocal %91 : vector<2x1xf32> -> vector<2x1xf32>
    %93 = vector.broadcast %92 : vector<2x1xf32> to vector<2x5xf32>
    %94 = arith.mulf %89, %93 : vector<2x5xf32>
    %c0_55 = arith.constant 0 : index
    %c0_56 = arith.constant 0 : index
    %95 = vector.load %arg4[%c0_55, %c0_56] : memref<2x5xf32, #tpu.memory_space<vmem>>, vector<2x5xf32>
    tpu.vector_store %arg4[%c0_55, %c0_56], %94 {strides = array<i32>} : memref<2x5xf32, #tpu.memory_space<vmem>>, vector<2x5xf32>,
    return
  }
}

</mosaic_0001>

<llo_original>
// kernel: cnn_forward.1
$region0: #{cnn_forward.1}
  #allocation0 [shape = 'u32[]', space=smem, size = 0x4, offset = 0x4, fixed_abs, tag = 'smem constant byte address 0x4 - core index']
  #allocation1 [shape = 'u32[144,128]{1,0:T(1,128)}', space=vmem, size = 0x12000, scoped, tag = 'internal scratch']
  %s0 = inlined_call_operand.vmem [shape: f32[37,512], index: 0, kind: input, shape index: {}]
  %s1 = inlined_call_operand.vmem [shape: f32[16,37], index: 1, kind: input, shape index: {}]
  %s2 = inlined_call_operand.vmem [shape: f32[5,16,256], index: 2, kind: input, shape index: {}]
  %s3 = inlined_call_operand.vmem [shape: f32[1,5], index: 3, kind: input, shape index: {}]
  %s4 = inlined_call_operand.hbm [shape: f32[2,5], index: 4, kind: output, shape index: {}]
  %s5 = sld [smem:[#allocation0]]
  $region26: #{cnn_forward.1} parent=0
    _
  %s7 = ssub.s32 1, %s5
  %s8 = scalar_select 0, %s7, %s5
  $region1: #{cnn_forward.1} parent=0
    #allocation2 [shape = 'u8[1024]{0}', space=vmem, size = 0x400, scoped, tag = 'output window, operand 0, single buffered']
    #allocation3 [shape = 's32[1]{0}', space=sflag, size = 0x4, scoped, tag = 'scoped memory for cnn_forward.1']
    %9 = vsyncpa [#allocation3], 0
    // Predicated region
    $region2: #{cnn_forward.1} parent=1 // pred_check
      _
    $region3: #{cnn_forward.1} parent=1 // pred_check_branch
      %11 = sbr.rel (0) target = $region5
    $region4: #{cnn_forward.1} parent=1 // pred_region
      _
    $region5: #{cnn_forward.1} parent=1 // pred_fallthru
      _
    // Predicated region
    $region6: #{cnn_forward.1} parent=1 // pred_check
      _
    $region7: #{cnn_forward.1} parent=1 // pred_check_branch
      %13 = sbr.rel (0) target = $region9
    $region8: #{cnn_forward.1} parent=1 // pred_region
      _
    $region9: #{cnn_forward.1} parent=1 // pred_fallthru
      _
    // Predicated region
    $region10: #{cnn_forward.1} parent=1 // pred_check
      _
    $region11: #{cnn_forward.1} parent=1 // pred_check_branch
      %15 = sbr.rel (0) target = $region13
    $region12: #{cnn_forward.1} parent=1 // pred_region
      _
    $region13: #{cnn_forward.1} parent=1 // pred_fallthru
      _
    // Predicated region
    $region14: #{cnn_forward.1} parent=1 // pred_check
      _
    $region15: #{cnn_forward.1} parent=1 // pred_check_branch
      %17 = sbr.rel (0) target = $region17
    $region16: #{cnn_forward.1} parent=1 // pred_region
      _
    $region17: #{cnn_forward.1} parent=1 // pred_fallthru
      _
    %v18 = vld [vmem:[%s1] sm:$0xff]
    %v19 = vld [vmem:[%s1 + $0x8] sm:$0xff]
    %v20 = vld [vmem:[%s0] sm:$0xff]
    %v21 = vld [vmem:[%s0 + $0x8] sm:$0xff]
    %v22 = vld [vmem:[%s0 + $0x10] sm:$0xff]
    %v23 = vld [vmem:[%s0 + $0x18] sm:$0xff]
    %v24 = vld [vmem:[%s0 + $0x20] sm:$0xff]
    %v25 = vld [vmem:[%s0 + $0x28] sm:$0xff]
    %v26 = vld [vmem:[%s0 + $0x30] sm:$0xff]
    %v27 = vld [vmem:[%s0 + $0x38] sm:$0xff]
    %v28 = vld [vmem:[%s0 + $0x40] sm:$0xff]
    %v29 = vld [vmem:[%s0 + $0x48] sm:$0xff]
    %v30 = vld [vmem:[%s0 + $0x50] sm:$0xff]
    %v31 = vld [vmem:[%s0 + $0x58] sm:$0xff]
    %v32 = vld [vmem:[%s0 + $0x60] sm:$0xff]
    %v33 = vld [vmem:[%s0 + $0x68] sm:$0xff]
    %v34 = vld [vmem:[%s0 + $0x70] sm:$0xff]
    %v35 = vld [vmem:[%s0 + $0x78] sm:$0xff]
    %v36 = vld [vmem:[%s0 + $0x80] sm:$0x1f]
    %v37 = vld [vmem:[%s0 + $0x88] sm:$0x1f]
    %v38 = vld [vmem:[%s0 + $0x90] sm:$0x1f]
    %v39 = vld [vmem:[%s0 + $0x98] sm:$0x1f]
    %vm40 = vcmask 302080
    %v42 = vsel %vm40, %v18, 0
    %v45 = vsel %vm40, %v19, 0
    %vm47 = vcmask 1044480
    %v49 = vsel %vm47, %v36, 0
    %v52 = vsel %vm47, %v37, 0
    %v55 = vsel %vm47, %v38, 0
    %v58 = vsel %vm47, %v39, 0
    %60 = vmatprep.subr.mxu0 %v21
    %61 = vmatpush1.msra.mxu0 %v20
    %62 = vmatprep.subr.mxu0 %v25
    %63 = vmatpush1.msra.mxu0 %v24
    %64 = vmatprep.subr.mxu0 %v29
    %65 = vmatpush1.msra.mxu0 %v28
    %66 = vmatprep.subr.mxu0 %v33
    %67 = vmatpush1.msra.mxu0 %v32
    %68 = vmatprep.subr.mxu0 %v52
    %69 = vmatpush1.msra.mxu0 %v49
    %70 = vmatprep.subr.mxu0 0.0
    %71 = vmatpush1.msra.mxu0 0.0
    %72 = vmatprep.subr.mxu0 0.0
    %73 = vmatpush1.msra.mxu0 0.0
    %74 = vmatprep.subr.mxu0 0.0
    %75 = vmatpush1.msra.mxu0 0.0
    %76 = vmatprep.subr.mxu0 0.0
    %77 = vmatpush1.msra.mxu0 0.0
    %78 = vmatprep.subr.mxu0 0.0
    %79 = vmatpush1.msra.mxu0 0.0
    %80 = vmatprep.subr.mxu0 0.0
    %81 = vmatpush1.msra.mxu0 0.0
    %82 = vmatprep.subr.mxu0 0.0
    %83 = vmatpush1.msra.mxu0 0.0
    %84 = vmatprep.subr.mxu0 0.0
    %85 = vmatpush1.msra.mxu0 0.0
    %86 = vmatprep.subr.mxu0 0.0
    %87 = vmatpush1.msra.mxu0 0.0
    %88 = vmatprep.subr.mxu0 0.0
    %89 = vmatpush1.msra.mxu0 0.0
    %90 = vmatprep.subr.mxu0 0.0
    %91 = vmatpush1.msra.mxu0 0.0
    %92 = vmatprep.subr.mxu0 0.0
    %93 = vmatpush1.msra.mxu0 0.0
    %94 = vmatprep.subr.mxu0 0.0
    %95 = vmatpush1.msra.mxu0 0.0
    %96 = vmatprep.subr.mxu0 0.0
    %97 = vmatpush1.msra.mxu0 0.0
    %98 = vmatprep.subr.mxu0 0.0
    %99 = vmatpush1.msra.mxu0 0.0
    %100 = vmatprep.subr.mxu0 0.0
    %101 = vmatpush1.msra.mxu0 0.0
    %102 = vmatprep.subr.mxu0 0.0
    %103 = vmatpush1.msra.mxu0 0.0
    %104 = vmatprep.subr.mxu0 0.0
    %105 = vmatpush1.msra.mxu0 0.0
    %106 = vmatprep.subr.mxu0 0.0
    %107 = vmatpush1.msra.mxu0 0.0
    %108 = vmatprep.subr.mxu0 0.0
    %109 = vmatpush1.msra.mxu0 0.0
    %110 = vmatprep.subr.mxu0 0.0
    %111 = vmatpush1.msra.mxu0 0.0
    %112 = vmatprep.subr.mxu0 0.0
    %113 = vmatpush1.msra.mxu0 0.0
    %114 = vmatprep.subr.mxu0 0.0
    %115 = vmatpush1.msra.mxu0 0.0
    %116 = vmatprep.subr.mxu0 0.0
    %117 = vmatpush1.msra.mxu0 0.0
    %118 = vmatprep.subr.mxu0 0.0
    %119 = vmatpush1.msra.mxu0 0.0
    %120 = vmatprep.subr.mxu0 0.0
    %121 = vmatpush1.msra.mxu0 0.0
    %122 = vmatprep.subr.mxu0 0.0
    %123 = vmatpush1.msra.mxu0 0.0
    %124 = vmatprep.mubr.f32.mxu0 0.0
    %125 = vmatmul.mubr.f32.gmra.mrb[0].mxu0 %v42
    %v126 = vpop.f32.mrb[0].mxu0
    %v127 = vadd.f32 0.0, %v126
    %v128 = vpop.f32.mrb[0].mxu0
    %v129 = vadd.f32 0.0, %v128
    %130 = vmatprep.mubr.f32.mxu0 0.0
    %131 = vmatmul.mubr.f32.gmra.mrb[0].mxu0 %v45
    %v132 = vpop.f32.mrb[0].mxu0
    %v133 = vadd.f32 0.0, %v132
    %v134 = vpop.f32.mrb[0].mxu0
    %v135 = vadd.f32 0.0, %v134
    %136 = vdwg.mxu0
    %137 = vmatprep.subr.mxu0 %v23
    %138 = vmatpush1.msra.mxu0 %v22
    %139 = vmatprep.subr.mxu0 %v27
    %140 = vmatpush1.msra.mxu0 %v26
    %141 = vmatprep.subr.mxu0 %v31
    %142 = vmatpush1.msra.mxu0 %v30
    %143 = vmatprep.subr.mxu0 %v35
    %144 = vmatpush1.msra.mxu0 %v34
    %145 = vmatprep.subr.mxu0 %v58
    %146 = vmatpush1.msra.mxu0 %v55
    %147 = vmatprep.subr.mxu0 0.0
    %148 = vmatpush1.msra.mxu0 0.0
    %149 = vmatprep.subr.mxu0 0.0
    %150 = vmatpush1.msra.mxu0 0.0
    %151 = vmatprep.subr.mxu0 0.0
    %152 = vmatpush1.msra.mxu0 0.0
    %153 = vmatprep.subr.mxu0 0.0
    %154 = vmatpush1.msra.mxu0 0.0
    %155 = vmatprep.subr.mxu0 0.0
    %156 = vmatpush1.msra.mxu0 0.0
    %157 = vmatprep.subr.mxu0 0.0
    %158 = vmatpush1.msra.mxu0 0.0
    %159 = vmatprep.subr.mxu0 0.0
    %160 = vmatpush1.msra.mxu0 0.0
    %161 = vmatprep.subr.mxu0 0.0
    %162 = vmatpush1.msra.mxu0 0.0
    %163 = vmatprep.subr.mxu0 0.0
    %164 = vmatpush1.msra.mxu0 0.0
    %165 = vmatprep.subr.mxu0 0.0
    %166 = vmatpush1.msra.mxu0 0.0
    %167 = vmatprep.subr.mxu0 0.0
    %168 = vmatpush1.msra.mxu0 0.0
    %169 = vmatprep.subr.mxu0 0.0
    %170 = vmatpush1.msra.mxu0 0.0
    %171 = vmatprep.subr.mxu0 0.0
    %172 = vmatpush1.msra.mxu0 0.0
    %173 = vmatprep.subr.mxu0 0.0
    %174 = vmatpush1.msra.mxu0 0.0
    %175 = vmatprep.subr.mxu0 0.0
    %176 = vmatpush1.msra.mxu0 0.0
    %177 = vmatprep.subr.mxu0 0.0
    %178 = vmatpush1.msra.mxu0 0.0
    %179 = vmatprep.subr.mxu0 0.0
    %180 = vmatpush1.msra.mxu0 0.0
    %181 = vmatprep.subr.mxu0 0.0
    %182 = vmatpush1.msra.mxu0 0.0
    %183 = vmatprep.subr.mxu0 0.0
    %184 = vmatpush1.msra.mxu0 0.0
    %185 = vmatprep.subr.mxu0 0.0
    %186 = vmatpush1.msra.mxu0 0.0
    %187 = vmatprep.subr.mxu0 0.0
    %188 = vmatpush1.msra.mxu0 0.0
    %189 = vmatprep.subr.mxu0 0.0
    %190 = vmatpush1.msra.mxu0 0.0
    %191 = vmatprep.subr.mxu0 0.0
    %192 = vmatpush1.msra.mxu0 0.0
    %193 = vmatprep.subr.mxu0 0.0
    %194 = vmatpush1.msra.mxu0 0.0
    %195 = vmatprep.subr.mxu0 0.0
    %196 = vmatpush1.msra.mxu0 0.0
    %197 = vmatprep.subr.mxu0 0.0
    %198 = vmatpush1.msra.mxu0 0.0
    %199 = vmatprep.subr.mxu0 0.0
    %200 = vmatpush1.msra.mxu0 0.0
    %201 = vmatprep.mubr.f32.mxu0 0.0
    %202 = vmatmul.mubr.f32.gmra.mrb[0].mxu0 %v42
    %v203 = vpop.f32.mrb[0].mxu0
    %v204 = vadd.f32 0.0, %v203
    %v205 = vpop.f32.mrb[0].mxu0
    %v206 = vadd.f32 0.0, %v205
    %207 = vmatprep.mubr.f32.mxu0 0.0
    %208 = vmatmul.mubr.f32.gmra.mrb[0].mxu0 %v45
    %v209 = vpop.f32.mrb[0].mxu0
    %v210 = vadd.f32 0.0, %v209
    %v211 = vpop.f32.mrb[0].mxu0
    %v212 = vadd.f32 0.0, %v211
    %213 = vdwg.mxu0
    %v214 = vmax.f32 %v127, 0.0
    %v215 = vmax.f32 %v129, 0.0
    %v216 = vmax.f32 %v133, 0.0
    %v217 = vmax.f32 %v135, 0.0
    %v218 = vld [vmem:[%s2] sm:$0xff]
    %v219 = vld [vmem:[%s2 + $0x8] sm:$0xff]
    %v220 = vld [vmem:[%s2 + $0x10] sm:$0xff]
    %v221 = vld [vmem:[%s2 + $0x18] sm:$0xff]
    %v222 = vmul.f32 %v214, %v218
    %v223 = vmul.f32 %v215, %v219
    %v224 = vmul.f32 %v216, %v220
    %v225 = vmul.f32 %v217, %v221
    %v226 = vadd.f32 %v222, %v223
    %227 = vadd.xlane.f32.xlu0 %v226
    %v228 = vpop.xlane.xlu0 %227
    %v229 = vadd.f32 %v224, %v225
    %230 = vadd.xlane.f32.xlu0 %v229
    %v231 = vpop.xlane.xlu0 %230
    %v232 = vadd.f32 %v228, %v231
    %v233 = vrot.slane %v232, 4
    %v234 = vadd.f32 %v232, %v233
    %v235 = vrot.slane %v234, 2
    %v236 = vadd.f32 %v234, %v235
    %v237 = vrot.slane %v236, 1
    %v238 = vadd.f32 %v236, %v237
    %s239 = scalar_lea.vmem %s2, 32
    %v240 = vld [vmem:[%s239] sm:$0xff]
    %v241 = vld [vmem:[%s239 + $0x8] sm:$0xff]
    %v242 = vld [vmem:[%s239 + $0x10] sm:$0xff]
    %v243 = vld [vmem:[%s239 + $0x18] sm:$0xff]
    %v244 = vmul.f32 %v214, %v240
    %v245 = vmul.f32 %v215, %v241
    %v246 = vmul.f32 %v216, %v242
    %v247 = vmul.f32 %v217, %v243
    %v248 = vadd.f32 %v244, %v245
    %249 = vadd.xlane.f32.xlu0 %v248
    %v250 = vpop.xlane.xlu0 %249
    %v251 = vadd.f32 %v246, %v247
    %252 = vadd.xlane.f32.xlu0 %v251
    %v253 = vpop.xlane.xlu0 %252
    %v254 = vadd.f32 %v250, %v253
    %v255 = vrot.slane %v254, 4
    %v256 = vadd.f32 %v254, %v255
    %v257 = vrot.slane %v256, 2
    %v258 = vadd.f32 %v256, %v257
    %v259 = vrot.slane %v258, 1
    %v260 = vadd.f32 %v258, %v259
    %s261 = scalar_lea.vmem %s2, 64
    %v262 = vld [vmem:[%s261] sm:$0xff]
    %v263 = vld [vmem:[%s261 + $0x8] sm:$0xff]
    %v264 = vld [vmem:[%s261 + $0x10] sm:$0xff]
    %v265 = vld [vmem:[%s261 + $0x18] sm:$0xff]
    %v266 = vmul.f32 %v214, %v262
    %v267 = vmul.f32 %v215, %v263
    %v268 = vmul.f32 %v216, %v264
    %v269 = vmul.f32 %v217, %v265
    %v270 = vadd.f32 %v266, %v267
    %271 = vadd.xlane.f32.xlu0 %v270
    %v272 = vpop.xlane.xlu0 %271
    %v273 = vadd.f32 %v268, %v269
    %274 = vadd.xlane.f32.xlu0 %v273
    %v275 = vpop.xlane.xlu0 %274
    %v276 = vadd.f32 %v272, %v275
    %v277 = vrot.slane %v276, 4
    %v278 = vadd.f32 %v276, %v277
    %v279 = vrot.slane %v278, 2
    %v280 = vadd.f32 %v278, %v279
    %v281 = vrot.slane %v280, 1
    %v282 = vadd.f32 %v280, %v281
    %s283 = scalar_lea.vmem %s2, 96
    %v284 = vld [vmem:[%s283] sm:$0xff]
    %v285 = vld [vmem:[%s283 + $0x8] sm:$0xff]
    %v286 = vld [vmem:[%s283 + $0x10] sm:$0xff]
    %v287 = vld [vmem:[%s283 + $0x18] sm:$0xff]
    %v288 = vmul.f32 %v214, %v284
    %v289 = vmul.f32 %v215, %v285
    %v290 = vmul.f32 %v216, %v286
    %v291 = vmul.f32 %v217, %v287
    %v292 = vadd.f32 %v288, %v289
    %293 = vadd.xlane.f32.xlu0 %v292
    %v294 = vpop.xlane.xlu0 %293
    %v295 = vadd.f32 %v290, %v291
    %296 = vadd.xlane.f32.xlu0 %v295
    %v297 = vpop.xlane.xlu0 %296
    %v298 = vadd.f32 %v294, %v297
    %v299 = vrot.slane %v298, 4
    %v300 = vadd.f32 %v298, %v299
    %v301 = vrot.slane %v300, 2
    %v302 = vadd.f32 %v300, %v301
    %v303 = vrot.slane %v302, 1
    %v304 = vadd.f32 %v302, %v303
    %s305 = scalar_lea.vmem %s2, 128
    %v306 = vld [vmem:[%s305] sm:$0xff]
    %v307 = vld [vmem:[%s305 + $0x8] sm:$0xff]
    %v308 = vld [vmem:[%s305 + $0x10] sm:$0xff]
    %v309 = vld [vmem:[%s305 + $0x18] sm:$0xff]
    %v310 = vmul.f32 %v214, %v306
    %v311 = vmul.f32 %v215, %v307
    %v312 = vmul.f32 %v216, %v308
    %v313 = vmul.f32 %v217, %v309
    %v314 = vadd.f32 %v310, %v311
    %315 = vadd.xlane.f32.xlu0 %v314
    %v316 = vpop.xlane.xlu0 %315
    %v317 = vadd.f32 %v312, %v313
    %318 = vadd.xlane.f32.xlu0 %v317
    %v319 = vpop.xlane.xlu0 %318
    %v320 = vadd.f32 %v316, %v319
    %v321 = vrot.slane %v320, 4
    %v322 = vadd.f32 %v320, %v321
    %v323 = vrot.slane %v322, 2
    %v324 = vadd.f32 %v322, %v323
    %v325 = vrot.slane %v324, 1
    %v326 = vadd.f32 %v324, %v325
    %vm327 = vcmask 7168
    %v328 = vsel %vm327, %v238, %v260
    %vm329 = vcmask 15360
    %v330 = vsel %vm329, %v328, %v282
    %vm331 = vcmask 23552
    %v332 = vsel %vm331, %v330, %v304
    %vm333 = vcmask 31744
    %v334 = vsel %vm333, %v332, %v326
    %v335 = vmax.f32 %v204, 0.0
    %v336 = vmax.f32 %v206, 0.0
    %v337 = vmax.f32 %v210, 0.0
    %v338 = vmax.f32 %v212, 0.0
    %v339 = vmul.f32 %v335, %v218
    %v340 = vmul.f32 %v336, %v219
    %v341 = vmul.f32 %v337, %v220
    %v342 = vmul.f32 %v338, %v221
    %v343 = vadd.f32 %v339, %v340
    %344 = vadd.xlane.f32.xlu0 %v343
    %v345 = vpop.xlane.xlu0 %344
    %v346 = vadd.f32 %v341, %v342
    %347 = vadd.xlane.f32.xlu0 %v346
    %v348 = vpop.xlane.xlu0 %347
    %v349 = vadd.f32 %v345, %v348
    %v350 = vrot.slane %v349, 4
    %v351 = vadd.f32 %v349, %v350
    %v352 = vrot.slane %v351, 2
    %v353 = vadd.f32 %v351, %v352
    %v354 = vrot.slane %v353, 1
    %v355 = vadd.f32 %v353, %v354
    %v356 = vmul.f32 %v335, %v240
    %v357 = vmul.f32 %v336, %v241
    %v358 = vmul.f32 %v337, %v242
    %v359 = vmul.f32 %v338, %v243
    %v360 = vadd.f32 %v356, %v357
    %361 = vadd.xlane.f32.xlu0 %v360
    %v362 = vpop.xlane.xlu0 %361
    %v363 = vadd.f32 %v358, %v359
    %364 = vadd.xlane.f32.xlu0 %v363
    %v365 = vpop.xlane.xlu0 %364
    %v366 = vadd.f32 %v362, %v365
    %v367 = vrot.slane %v366, 4
    %v368 = vadd.f32 %v366, %v367
    %v369 = vrot.slane %v368, 2
    %v370 = vadd.f32 %v368, %v369
    %v371 = vrot.slane %v370, 1
    %v372 = vadd.f32 %v370, %v371
    %v373 = vmul.f32 %v335, %v262
    %v374 = vmul.f32 %v336, %v263
    %v375 = vmul.f32 %v337, %v264
    %v376 = vmul.f32 %v338, %v265
    %v377 = vadd.f32 %v373, %v374
    %378 = vadd.xlane.f32.xlu0 %v377
    %v379 = vpop.xlane.xlu0 %378
    %v380 = vadd.f32 %v375, %v376
    %381 = vadd.xlane.f32.xlu0 %v380
    %v382 = vpop.xlane.xlu0 %381
    %v383 = vadd.f32 %v379, %v382
    %v384 = vrot.slane %v383, 4
    %v385 = vadd.f32 %v383, %v384
    %v386 = vrot.slane %v385, 2
    %v387 = vadd.f32 %v385, %v386
    %v388 = vrot.slane %v387, 1
    %v389 = vadd.f32 %v387, %v388
    %v390 = vmul.f32 %v335, %v284
    %v391 = vmul.f32 %v336, %v285
    %v392 = vmul.f32 %v337, %v286
    %v393 = vmul.f32 %v338, %v287
    %v394 = vadd.f32 %v390, %v391
    %395 = vadd.xlane.f32.xlu0 %v394
    %v396 = vpop.xlane.xlu0 %395
    %v397 = vadd.f32 %v392, %v393
    %398 = vadd.xlane.f32.xlu0 %v397
    %v399 = vpop.xlane.xlu0 %398
    %v400 = vadd.f32 %v396, %v399
    %v401 = vrot.slane %v400, 4
    %v402 = vadd.f32 %v400, %v401
    %v403 = vrot.slane %v402, 2
    %v404 = vadd.f32 %v402, %v403
    %v405 = vrot.slane %v404, 1
    %v406 = vadd.f32 %v404, %v405
    %v407 = vmul.f32 %v335, %v306
    %v408 = vmul.f32 %v336, %v307
    %v409 = vmul.f32 %v337, %v308
    %v410 = vmul.f32 %v338, %v309
    %v411 = vadd.f32 %v407, %v408
    %412 = vadd.xlane.f32.xlu0 %v411
    %v413 = vpop.xlane.xlu0 %412
    %v414 = vadd.f32 %v409, %v410
    %415 = vadd.xlane.f32.xlu0 %v414
    %v416 = vpop.xlane.xlu0 %415
    %v417 = vadd.f32 %v413, %v416
    %v418 = vrot.slane %v417, 4
    %v419 = vadd.f32 %v417, %v418
    %v420 = vrot.slane %v419, 2
    %v421 = vadd.f32 %v419, %v420
    %v422 = vrot.slane %v421, 1
    %v423 = vadd.f32 %v421, %v422
    %v424 = vsel %vm327, %v355, %v372
    %v425 = vsel %vm329, %v424, %v389
    %v426 = vsel %vm331, %v425, %v406
    %v427 = vsel %vm333, %v426, %v423
    %v429 = vrot.slane %v427, 7
    %vm431 = vcmask 1040384
    %v432 = vsel %vm431, %v334, %v429
    %v433 = vld [vmem:[%s3] sm:$0x1]
    %v435 = vlaneseq
    %v436 = vshrl.u32 %v435, 7
    %v437 = vsub.s32 0, %v436
    %v438 = vrot.slane %v433, %v437
    %v440 = vadd.f32 %v432, %v438
    %vm441 = vcmask 33792
    %v442 = vsel %vm441, %v440, -inf
    %443 = vmax.xlane.f32.xlu0 %v442
    %v444 = vpop.xlane.xlu0 %443
    %v445 = vsub.f32 %v440, %v444
    %v446 = vmul.f32 %v445, 1.442695
    %v447 = vpow.pop %v446
    %v448 = vsel %vm441, %v447, 0.0
    %449 = vadd.xlane.f32.xlu0 %v448
    %v450 = vpop.xlane.xlu0 %449
    %v451 = vrcp.pop %v450
    %v452 = vmul.f32 %v447, %v451
    %453 = vst.msk [vmem:[#allocation2] sm:$0x3] %vm441, %v452
    // Predicated region
    $region18: #{cnn_forward.1} parent=1 // pred_check
      _
    $region19: #{cnn_forward.1} parent=1 // pred_check_branch
      %455 = sbr.rel (0) target = $region21
    $region20: #{cnn_forward.1} parent=1 // pred_region
      %s457 = ssub.s32 32, 32
      %458 = vsyncadd [#allocation3], %s457
      %s460 = sshll.u32 [#allocation2], 4
      %s461 = int_to_ptr.vmem [resolvable:$true] %s460
      %463 = dma.vmem_to_hbm [thread:$0]  %s461, 32, %s4, [#allocation3]
    $region21: #{cnn_forward.1} parent=1 // pred_fallthru
      _
    // Predicated region
    $region22: #{cnn_forward.1} parent=1 // pred_check
      _
    $region23: #{cnn_forward.1} parent=1 // pred_check_branch
      %465 = sbr.rel (0) target = $region25
    $region24: #{cnn_forward.1} parent=1 // pred_region
      %466 = dma.done [#allocation3], 32
    $region25: #{cnn_forward.1} parent=1 // pred_fallthru
      _
    %467 = vsyncpa [#allocation3], 1

</llo_original>
